<compile_context>
chip_gen: v6e
topology: v6e:2x2x1
jax: 0.10.0
libtpu: 0.0.40
codegen_flags: <defaults>
</compile_context>

<pallas_src>
import jax
import jax.numpy as jnp
from jax.experimental import pallas as pl
from jax.experimental.pallas import tpu as pltpu


def rnnnet_kernel(xsteps_ref, whh_bd_ref, weff_ref, beff_ref, out_ref):
    """Fused bidirectional tanh-RNN recurrence + folded (fc1 . fc2) head.

    xsteps_ref : (T, B, 2H) f32  pre-projected inputs; [s, :, :H] = fwd input at time s,
                 [s, :, H:] = bwd input at time T-1-s (time reversal done in the wrapper).
    whh_bd_ref : (2H, 2H) f32    block_diag(W_hh_fwd^T, W_hh_bwd^T)
    weff_ref   : (T, 2H)  f32    rows of W1^T @ w2^T, permuted to the fused-loop layout
                                 [fwd_s | bwd_{T-1-s}] of the stacked hidden state.
    beff_ref   : (1, 1)   f32    b1 @ w2^T + b2
    out_ref    : (B, 1)   f32
    """
    T, B, H2 = xsteps_ref.shape
    whh = whh_bd_ref[...]                                     # (2H, 2H)
    weff = weff_ref[...]                                      # (T, 2H)

    # Step 0: previous hidden state is zero -> skip the matmul.
    h = jnp.tanh(xsteps_ref[0])                               # (B, 2H)
    acc = h * weff[0:1, :]                                    # folded head, VPU MAC

    # Steps 1..T-1: one (B,2H)@(2H,2H) MXU matmul + one tanh (EUP) per step; the folded head
    # contribution is a VPU multiply-add that hides in the serial matmul->tanh latency chain.
    # (T is small: keep the static unroll.  For T >> 32 switch to lax.fori_loop + VMEM scratch.)
    for s in range(1, T):
        h = jnp.tanh(xsteps_ref[s]
                     + jnp.dot(h, whh, preferred_element_type=jnp.float32))
        acc = acc + h * weff[s:s + 1, :]

    # Single lane reduction for the final scalar head (no MXU epilogue matmuls).
    out = jnp.sum(acc, axis=-1, keepdims=True) + beff_ref[...]
    out_ref[...] = out.astype(out_ref.dtype)


def init_params(key, vocab_size, emb_size, hidden_dim, seq_len):
    ks = jax.random.split(key, 12)
    kH = 1.0 / jnp.sqrt(hidden_dim)
    fan1 = hidden_dim * seq_len * 2
    k1 = 1.0 / jnp.sqrt(fan1)
    k2 = 1.0 / jnp.sqrt(256)
    u = lambda k, shape, b: jax.random.uniform(k, shape, jnp.float32, -b, b)
    return {
        "embedding": jax.random.normal(ks[0], (vocab_size, emb_size), jnp.float32),
        "wih_f": u(ks[1], (hidden_dim, emb_size), kH),
        "whh_f": u(ks[2], (hidden_dim, hidden_dim), kH),
        "bih_f": u(ks[3], (hidden_dim,), kH),
        "bhh_f": u(ks[4], (hidden_dim,), kH),
        "wih_b": u(ks[5], (hidden_dim, emb_size), kH),
        "whh_b": u(ks[6], (hidden_dim, hidden_dim), kH),
        "bih_b": u(ks[7], (hidden_dim,), kH),
        "bhh_b": u(ks[8], (hidden_dim,), kH),
        "w1": u(ks[9], (256, fan1), k1),
        "b1": u(ks[10], (256,), k1),
        "w2": u(ks[11], (1, 256), k2),
        "b2": jnp.zeros((1,), jnp.float32),
    }


def prepare_params(params, seq_len):
    """One-time repacking of PyTorch-style parameters (NOT on the per-call forward path)."""
    H = params["whh_f"].shape[0]
    T = seq_len

    # Pre-project the embedding table through both directions' input weights; fold biases.
    wih_cat = jnp.concatenate([params["wih_f"].T, params["wih_b"].T], axis=1)      # (E, 2H)
    bias_cat = jnp.concatenate(
        [params["bih_f"] + params["bhh_f"], params["bih_b"] + params["bhh_b"]])    # (2H,)
    emb_proj = (jnp.dot(params["embedding"], wih_cat,
                        precision=jax.lax.Precision.HIGHEST) + bias_cat)           # (V, 2H)

    # Block-diagonal recurrent weight for the stacked [fwd | bwd] hidden state.
    z = jnp.zeros((H, H), jnp.float32)
    whh_bd = jnp.concatenate(
        [jnp.concatenate([params["whh_f"].T, z], axis=1),
         jnp.concatenate([z, params["whh_b"].T], axis=1)], axis=0)                 # (2H, 2H)

    # Fold fc1 . fc2 (no nonlinearity in between; Dropout == identity at inference):
    #   out = (flat @ W1^T + b1) @ w2^T + b2 = flat @ (W1^T @ w2^T) + (b1 @ w2^T + b2)
    # Computed with exact f32 VPU-style reductions (tiny, done once).
    w_eff = jnp.sum(params["w1"] * params["w2"].T, axis=0)                         # (T*2H,)
    b_eff = (jnp.sum(params["w2"][0] * params["b1"]) + params["b2"][0]).reshape(1, 1)

    # Permute w_eff from PyTorch's per-timestep [fwd_t | bwd_t] layout to the fused-loop
    # layout [fwd_s | bwd_{T-1-s}] so the kernel does a plain per-step multiply.
    w_eff3 = w_eff.reshape(T, 2, H)
    w_eff_steps = jnp.concatenate(
        [w_eff3[:, 0, :], jnp.flip(w_eff3[:, 1, :], axis=0)], axis=-1)             # (T, 2H)

    return {
        "emb_proj": emb_proj,
        "whh_bd": whh_bd,
        "w_eff_steps": w_eff_steps,
        "b_eff": b_eff,
    }


@jax.jit
def rnnnet_forward(x_idx, prepped):
    emb_proj = prepped["emb_proj"]
    H2 = emb_proj.shape[1]
    H = H2 // 2

    # Gather straight into the projected 2H space (plain-JAX glue; tiny arrays).
    x_proj = jnp.take(emb_proj, x_idx, axis=0)                                     # (B, T, 2H)
    B, T, _ = x_proj.shape

    # Time-reverse the bwd half once so the kernel's fused loop needs no per-step shuffles,
    # and put T first so the kernel uses simple leading-axis indexing.
    x_steps = jnp.concatenate(
        [x_proj[..., :H], jnp.flip(x_proj[..., H:], axis=1)], axis=-1)             # (B, T, 2H)
    x_steps = jnp.transpose(x_steps, (1, 0, 2))                                    # (T, B, 2H)

    # Pad the batch (sublane) dimension to a multiple of 8 so vregs are fully occupied.
    B_pad = max(8, ((B + 7) // 8) * 8)
    if B_pad != B:
        x_steps = jnp.pad(x_steps, ((0, 0), (0, B_pad - B), (0, 0)))

    vmem = pl.BlockSpec(memory_space=pltpu.MemorySpace.VMEM)
    out = pl.pallas_call(
        rnnnet_kernel,
        out_shape=jax.ShapeDtypeStruct((B_pad, 1), jnp.float32),
        in_specs=[vmem, vmem, vmem, vmem],
        out_specs=vmem,
    )(x_steps, prepped["whh_bd"], prepped["w_eff_steps"], prepped["b_eff"])
    return out[:B]


def rnnnet_reference(x_idx, params):
    # Pure-JAX reference mirroring torch.nn.RNN(bidirectional=True) + the MLP head.
    xemb = jnp.take(params["embedding"], x_idx, axis=0)
    B, T, E = xemb.shape
    H = params["whh_f"].shape[0]

    def run(w_ih, w_hh, b_ih, b_hh, reverse):
        h = jnp.zeros((B, H), jnp.float32)
        outs = [None] * T
        ts = range(T - 1, -1, -1) if reverse else range(T)
        for t in ts:
            h = jnp.tanh(xemb[:, t, :] @ w_ih.T + b_ih + h @ w_hh.T + b_hh)
            outs[t] = h
        return outs

    fwd = run(params["wih_f"], params["whh_f"], params["bih_f"], params["bhh_f"], False)
    bwd = run(params["wih_b"], params["whh_b"], params["bih_b"], params["bhh_b"], True)
    flat = jnp.concatenate([p for t in range(T) for p in (fwd[t], bwd[t])], axis=-1)
    h1 = flat @ params["w1"].T + params["b1"]
    return h1 @ params["w2"].T + params["b2"]


if __name__ == "__main__":
    vocab_size, emb_size, hidden_dim, seq_len, batch = 50, 16, 32, 8, 2

    key = jax.random.PRNGKey(0)
    k_param, k_x = jax.random.split(key)
    params = init_params(k_param, vocab_size, emb_size, hidden_dim, seq_len)
    x = jax.random.randint(k_x, (batch, seq_len), 0, vocab_size, dtype=jnp.int32)

    # One-time repack (outside the hot per-call path).
    prepped = prepare_params(params, seq_len)
    prepped = jax.tree_util.tree_map(jax.block_until_ready, prepped)

    out = rnnnet_forward(x, prepped)
    out = jax.block_until_ready(out)

    ref = rnnnet_reference(x, params)
    assert out.shape == (batch, 1), out.shape
    assert jnp.allclose(out, ref, atol=1e-4, rtol=1e-4), (out, ref)

    print("KERNEL_OK")
</pallas_src>

<mosaic_0001>
module attributes {stable_mosaic.version = 11 : i64} {
  func.func @rnnnet_kernel(%arg0: memref<8x8x64xf32, #tpu.memory_space<vmem>>, %arg1: memref<64x64xf32, #tpu.memory_space<vmem>>, %arg2: memref<8x64xf32, #tpu.memory_space<vmem>>, %arg3: memref<1x1xf32, #tpu.memory_space<vmem>>, %arg4: memref<8x1xf32, #tpu.memory_space<vmem>>) attributes {dimension_semantics = [], scalar_prefetch = 0 : i64, scratch_operands = 0 : i64, tpu.core_type = #tpu.core_type<tc>} {
    %c0 = arith.constant 0 : index
    %c0_0 = arith.constant 0 : index
    %0 = vector.load %arg1[%c0, %c0_0] : memref<64x64xf32, #tpu.memory_space<vmem>>, vector<64x64xf32>
    %c0_1 = arith.constant 0 : index
    %c0_2 = arith.constant 0 : index
    %1 = vector.load %arg2[%c0_1, %c0_2] : memref<8x64xf32, #tpu.memory_space<vmem>>, vector<8x64xf32>
    %c0_3 = arith.constant 0 : index
    %c0_4 = arith.constant 0 : index
    %c0_5 = arith.constant 0 : index
    %2 = vector.load %arg0[%c0_3, %c0_4, %c0_5] : memref<8x8x64xf32, #tpu.memory_space<vmem>>, vector<1x8x64xf32>
    %3 = vector.shape_cast %2 : vector<1x8x64xf32> to vector<8x64xf32>
    %4 = math.tanh %3 : vector<8x64xf32>
    %5 = vector.extract_strided_slice %1 {offsets = [0, 0], sizes = [1, 64], strides = [1, 1]} : vector<8x64xf32> to vector<1x64xf32>
    %6 = vector.broadcast %5 : vector<1x64xf32> to vector<8x64xf32>
    %7 = arith.mulf %4, %6 : vector<8x64xf32>
    %c1 = arith.constant 1 : index
    %c0_6 = arith.constant 0 : index
    %c0_7 = arith.constant 0 : index
    %8 = vector.load %arg0[%c1, %c0_6, %c0_7] : memref<8x8x64xf32, #tpu.memory_space<vmem>>, vector<1x8x64xf32>
    %9 = vector.shape_cast %8 : vector<1x8x64xf32> to vector<8x64xf32>
    %cst = arith.constant dense<0.000000e+00> : vector<8x64xf32>
    %10 = tpu.matmul %4, %0, %cst {dimension_numbers = #tpu.dot_dimension_numbers<[1], [0], [0], [1], [0, 0, 1, 1], [], []>} : vector<8x64xf32>, vector<64x64xf32>, vector<8x64xf32> -> vector<8x64xf32>
    %11 = arith.addf %9, %10 : vector<8x64xf32>
    %12 = math.tanh %11 : vector<8x64xf32>
    %13 = vector.extract_strided_slice %1 {offsets = [1, 0], sizes = [1, 64], strides = [1, 1]} : vector<8x64xf32> to vector<1x64xf32>
    %14 = vector.broadcast %13 : vector<1x64xf32> to vector<8x64xf32>
    %15 = arith.mulf %12, %14 : vector<8x64xf32>
    %16 = arith.addf %7, %15 : vector<8x64xf32>
    %c2 = arith.constant 2 : index
    %c0_8 = arith.constant 0 : index
    %c0_9 = arith.constant 0 : index
    %17 = vector.load %arg0[%c2, %c0_8, %c0_9] : memref<8x8x64xf32, #tpu.memory_space<vmem>>, vector<1x8x64xf32>
    %18 = vector.shape_cast %17 : vector<1x8x64xf32> to vector<8x64xf32>
    %cst_10 = arith.constant dense<0.000000e+00> : vector<8x64xf32>
    %19 = tpu.matmul %12, %0, %cst_10 {dimension_numbers = #tpu.dot_dimension_numbers<[1], [0], [0], [1], [0, 0, 1, 1], [], []>} : vector<8x64xf32>, vector<64x64xf32>, vector<8x64xf32> -> vector<8x64xf32>
    %20 = arith.addf %18, %19 : vector<8x64xf32>
    %21 = math.tanh %20 : vector<8x64xf32>
    %22 = vector.extract_strided_slice %1 {offsets = [2, 0], sizes = [1, 64], strides = [1, 1]} : vector<8x64xf32> to vector<1x64xf32>
    %23 = vector.broadcast %22 : vector<1x64xf32> to vector<8x64xf32>
    %24 = arith.mulf %21, %23 : vector<8x64xf32>
    %25 = arith.addf %16, %24 : vector<8x64xf32>
    %c3 = arith.constant 3 : index
    %c0_11 = arith.constant 0 : index
    %c0_12 = arith.constant 0 : index
    %26 = vector.load %arg0[%c3, %c0_11, %c0_12] : memref<8x8x64xf32, #tpu.memory_space<vmem>>, vector<1x8x64xf32>
    %27 = vector.shape_cast %26 : vector<1x8x64xf32> to vector<8x64xf32>
    %cst_13 = arith.constant dense<0.000000e+00> : vector<8x64xf32>
    %28 = tpu.matmul %21, %0, %cst_13 {dimension_numbers = #tpu.dot_dimension_numbers<[1], [0], [0], [1], [0, 0, 1, 1], [], []>} : vector<8x64xf32>, vector<64x64xf32>, vector<8x64xf32> -> vector<8x64xf32>
    %29 = arith.addf %27, %28 : vector<8x64xf32>
    %30 = math.tanh %29 : vector<8x64xf32>
    %31 = vector.extract_strided_slice %1 {offsets = [3, 0], sizes = [1, 64], strides = [1, 1]} : vector<8x64xf32> to vector<1x64xf32>
    %32 = vector.broadcast %31 : vector<1x64xf32> to vector<8x64xf32>
    %33 = arith.mulf %30, %32 : vector<8x64xf32>
    %34 = arith.addf %25, %33 : vector<8x64xf32>
    %c4 = arith.constant 4 : index
    %c0_14 = arith.constant 0 : index
    %c0_15 = arith.constant 0 : index
    %35 = vector.load %arg0[%c4, %c0_14, %c0_15] : memref<8x8x64xf32, #tpu.memory_space<vmem>>, vector<1x8x64xf32>
    %36 = vector.shape_cast %35 : vector<1x8x64xf32> to vector<8x64xf32>
    %cst_16 = arith.constant dense<0.000000e+00> : vector<8x64xf32>
    %37 = tpu.matmul %30, %0, %cst_16 {dimension_numbers = #tpu.dot_dimension_numbers<[1], [0], [0], [1], [0, 0, 1, 1], [], []>} : vector<8x64xf32>, vector<64x64xf32>, vector<8x64xf32> -> vector<8x64xf32>
    %38 = arith.addf %36, %37 : vector<8x64xf32>
    %39 = math.tanh %38 : vector<8x64xf32>
    %40 = vector.extract_strided_slice %1 {offsets = [4, 0], sizes = [1, 64], strides = [1, 1]} : vector<8x64xf32> to vector<1x64xf32>
    %41 = vector.broadcast %40 : vector<1x64xf32> to vector<8x64xf32>
    %42 = arith.mulf %39, %41 : vector<8x64xf32>
    %43 = arith.addf %34, %42 : vector<8x64xf32>
    %c5 = arith.constant 5 : index
    %c0_17 = arith.constant 0 : index
    %c0_18 = arith.constant 0 : index
    %44 = vector.load %arg0[%c5, %c0_17, %c0_18] : memref<8x8x64xf32, #tpu.memory_space<vmem>>, vector<1x8x64xf32>
    %45 = vector.shape_cast %44 : vector<1x8x64xf32> to vector<8x64xf32>
    %cst_19 = arith.constant dense<0.000000e+00> : vector<8x64xf32>
    %46 = tpu.matmul %39, %0, %cst_19 {dimension_numbers = #tpu.dot_dimension_numbers<[1], [0], [0], [1], [0, 0, 1, 1], [], []>} : vector<8x64xf32>, vector<64x64xf32>, vector<8x64xf32> -> vector<8x64xf32>
    %47 = arith.addf %45, %46 : vector<8x64xf32>
    %48 = math.tanh %47 : vector<8x64xf32>
    %49 = vector.extract_strided_slice %1 {offsets = [5, 0], sizes = [1, 64], strides = [1, 1]} : vector<8x64xf32> to vector<1x64xf32>
    %50 = vector.broadcast %49 : vector<1x64xf32> to vector<8x64xf32>
    %51 = arith.mulf %48, %50 : vector<8x64xf32>
    %52 = arith.addf %43, %51 : vector<8x64xf32>
    %c6 = arith.constant 6 : index
    %c0_20 = arith.constant 0 : index
    %c0_21 = arith.constant 0 : index
    %53 = vector.load %arg0[%c6, %c0_20, %c0_21] : memref<8x8x64xf32, #tpu.memory_space<vmem>>, vector<1x8x64xf32>
    %54 = vector.shape_cast %53 : vector<1x8x64xf32> to vector<8x64xf32>
    %cst_22 = arith.constant dense<0.000000e+00> : vector<8x64xf32>
    %55 = tpu.matmul %48, %0, %cst_22 {dimension_numbers = #tpu.dot_dimension_numbers<[1], [0], [0], [1], [0, 0, 1, 1], [], []>} : vector<8x64xf32>, vector<64x64xf32>, vector<8x64xf32> -> vector<8x64xf32>
    %56 = arith.addf %54, %55 : vector<8x64xf32>
    %57 = math.tanh %56 : vector<8x64xf32>
    %58 = vector.extract_strided_slice %1 {offsets = [6, 0], sizes = [1, 64], strides = [1, 1]} : vector<8x64xf32> to vector<1x64xf32>
    %59 = vector.broadcast %58 : vector<1x64xf32> to vector<8x64xf32>
    %60 = arith.mulf %57, %59 : vector<8x64xf32>
    %61 = arith.addf %52, %60 : vector<8x64xf32>
    %c7 = arith.constant 7 : index
    %c0_23 = arith.constant 0 : index
    %c0_24 = arith.constant 0 : index
    %62 = vector.load %arg0[%c7, %c0_23, %c0_24] : memref<8x8x64xf32, #tpu.memory_space<vmem>>, vector<1x8x64xf32>
    %63 = vector.shape_cast %62 : vector<1x8x64xf32> to vector<8x64xf32>
    %cst_25 = arith.constant dense<0.000000e+00> : vector<8x64xf32>
    %64 = tpu.matmul %57, %0, %cst_25 {dimension_numbers = #tpu.dot_dimension_numbers<[1], [0], [0], [1], [0, 0, 1, 1], [], []>} : vector<8x64xf32>, vector<64x64xf32>, vector<8x64xf32> -> vector<8x64xf32>
    %65 = arith.addf %63, %64 : vector<8x64xf32>
    %66 = math.tanh %65 : vector<8x64xf32>
    %67 = vector.extract_strided_slice %1 {offsets = [7, 0], sizes = [1, 64], strides = [1, 1]} : vector<8x64xf32> to vector<1x64xf32>
    %68 = vector.broadcast %67 : vector<1x64xf32> to vector<8x64xf32>
    %69 = arith.mulf %66, %68 : vector<8x64xf32>
    %70 = arith.addf %61, %69 : vector<8x64xf32>
    %cst_26 = arith.constant dense<0.000000e+00> : vector<8xf32>
    %71 = vector.multi_reduction <add>, %70, %cst_26 [1] : vector<8x64xf32> to vector<8xf32>
    %72 = vector.shape_cast %71 : vector<8xf32> to vector<8x1xf32>
    %c0_27 = arith.constant 0 : index
    %c0_28 = arith.constant 0 : index
    %73 = vector.load %arg3[%c0_27, %c0_28] : memref<1x1xf32, #tpu.memory_space<vmem>>, vector<1x1xf32>
    %74 = vector.broadcast %73 : vector<1x1xf32> to vector<8x1xf32>
    %75 = arith.addf %72, %74 : vector<8x1xf32>
    %c0_29 = arith.constant 0 : index
    %c0_30 = arith.constant 0 : index
    %76 = vector.load %arg4[%c0_29, %c0_30] : memref<8x1xf32, #tpu.memory_space<vmem>>, vector<8x1xf32>
    tpu.vector_store %arg4[%c0_29, %c0_30], %75 {strides = array<i32>} : memref<8x1xf32, #tpu.memory_space<vmem>>, vector<8x1xf32>,
    return
  }
}

</mosaic_0001>

<llo_original>
// kernel: rnnnet_forward.1
$region0: #{rnnnet_forward.1}
  #allocation0 [shape = 'u32[]', space=smem, size = 0x4, offset = 0x4, fixed_abs, tag = 'smem constant byte address 0x4 - core index']
  #allocation1 [shape = 'u32[144,128]{1,0:T(1,128)}', space=vmem, size = 0x12000, scoped, tag = 'internal scratch']
  #allocation2 [shape = 'f32[1,1]{1,0:T(1,128)S(1)}', space=vmem, size = 0x200, scoped, tag = 'scoped memory for rnnnet_forward.1']
  %s0 = inlined_call_operand.vmem [shape: f32[8,8,64], index: 0, kind: input, shape index: {}]
  %s1 = inlined_call_operand.vmem [shape: f32[64,64], index: 1, kind: input, shape index: {}]
  %s2 = inlined_call_operand.vmem [shape: f32[8,64], index: 2, kind: input, shape index: {}]
  %s3 = inlined_call_operand.<no memory space> [shape: f32[1,1], index: 3, kind: input, shape index: {}]
  %s4 = inlined_call_operand.vmem [shape: f32[8,1], index: 4, kind: output, shape index: {}]
  %s5 = sld [smem:[#allocation0]]
  $region26: #{rnnnet_forward.1} parent=0
    _
  %s7 = ssub.s32 1, %s5
  %s8 = scalar_select 0, %s7, %s5
  %v9 = vstv %s3
  %10 = vst [vmem:[#allocation2] sm:$0x1] %v9
  // Predicated region
  $region2: #{rnnnet_forward.1} parent=0 // pred_check
    _
  $region3: #{rnnnet_forward.1} parent=0 // pred_check_branch
    %12 = sbr.rel (0) target = $region5
  $region4: #{rnnnet_forward.1} parent=0 // pred_region
    _
  $region5: #{rnnnet_forward.1} parent=0 // pred_fallthru
    _
  // Predicated region
  $region6: #{rnnnet_forward.1} parent=0 // pred_check
    _
  $region7: #{rnnnet_forward.1} parent=0 // pred_check_branch
    %14 = sbr.rel (0) target = $region9
  $region8: #{rnnnet_forward.1} parent=0 // pred_region
    _
  $region9: #{rnnnet_forward.1} parent=0 // pred_fallthru
    _
  // Predicated region
  $region10: #{rnnnet_forward.1} parent=0 // pred_check
    _
  $region11: #{rnnnet_forward.1} parent=0 // pred_check_branch
    %16 = sbr.rel (0) target = $region13
  $region12: #{rnnnet_forward.1} parent=0 // pred_region
    _
  $region13: #{rnnnet_forward.1} parent=0 // pred_fallthru
    _
  // Predicated region
  $region14: #{rnnnet_forward.1} parent=0 // pred_check
    _
  $region15: #{rnnnet_forward.1} parent=0 // pred_check_branch
    %18 = sbr.rel (0) target = $region17
  $region16: #{rnnnet_forward.1} parent=0 // pred_region
    _
  $region17: #{rnnnet_forward.1} parent=0 // pred_fallthru
    _
  %v19 = vld [vmem:[%s1] sm:$0xff]
  %v20 = vld [vmem:[%s1 + $0x8] sm:$0xff]
  %v21 = vld [vmem:[%s1 + $0x10] sm:$0xff]
  %v22 = vld [vmem:[%s1 + $0x18] sm:$0xff]
  %v23 = vld [vmem:[%s1 + $0x20] sm:$0xff]
  %v24 = vld [vmem:[%s1 + $0x28] sm:$0xff]
  %v25 = vld [vmem:[%s1 + $0x30] sm:$0xff]
  %v26 = vld [vmem:[%s1 + $0x38] sm:$0xff]
  %v27 = vld [vmem:[%s2] sm:$0xff]
  %v28 = vld [vmem:[%s0] sm:$0xff]
  %v29 = vtanh.pop %v28
  %v30 = vlaneseq
  %v31 = vshrl.u32 %v30, 7
  %v32 = vsub.s32 0, %v31
  %v33 = vrot.slane %v27, %v32
  %v34 = vmul.f32 %v29, %v33
  %s35 = scalar_lea.vmem %s0, 8
  %v36 = vld [vmem:[%s35] sm:$0xff]
  %vm37 = vcmask 523264
  %v39 = vsel %vm37, %v29, 0
  %41 = vmatprep.subr.mxu0 0.0
  %42 = vmatpush1.msra.mxu0 0.0
  %43 = vmatprep.subr.mxu0 0.0
  %44 = vmatpush1.msra.mxu0 0.0
  %45 = vmatprep.subr.mxu0 0.0
  %46 = vmatpush1.msra.mxu0 0.0
  %47 = vmatprep.subr.mxu0 0.0
  %48 = vmatpush1.msra.mxu0 0.0
  %49 = vmatprep.subr.mxu0 0.0
  %50 = vmatpush1.msra.mxu0 0.0
  %51 = vmatprep.subr.mxu0 0.0
  %52 = vmatpush1.msra.mxu0 0.0
  %53 = vmatprep.subr.mxu0 0.0
  %54 = vmatpush1.msra.mxu0 0.0
  %55 = vmatprep.subr.mxu0 0.0
  %56 = vmatpush1.msra.mxu0 0.0
  %57 = vmatprep.subr.mxu0 0.0
  %58 = vmatpush1.msra.mxu0 %v26
  %59 = vmatprep.subr.mxu0 0.0
  %60 = vmatpush1.msra.mxu0 %v25
  %61 = vmatprep.subr.mxu0 0.0
  %62 = vmatpush1.msra.mxu0 %v24
  %63 = vmatprep.subr.mxu0 0.0
  %64 = vmatpush1.msra.mxu0 %v23
  %65 = vmatprep.subr.mxu0 0.0
  %66 = vmatpush1.msra.mxu0 %v22
  %67 = vmatprep.subr.mxu0 0.0
  %68 = vmatpush1.msra.mxu0 %v21
  %69 = vmatprep.subr.mxu0 0.0
  %70 = vmatpush1.msra.mxu0 %v20
  %71 = vmatprep.subr.mxu0 0.0
  %72 = vmatpush1.msra.mxu0 %v19
  %73 = vmatprep.subr.mxu0 0.0
  %74 = vmatpush2.msra.mxu0 0.0
  %75 = vmatprep.subr.mxu0 0.0
  %76 = vmatpush2.msra.mxu0 0.0
  %77 = vmatprep.subr.mxu0 0.0
  %78 = vmatpush2.msra.mxu0 0.0
  %79 = vmatprep.subr.mxu0 0.0
  %80 = vmatpush2.msra.mxu0 0.0
  %81 = vmatprep.subr.mxu0 0.0
  %82 = vmatpush2.msra.mxu0 0.0
  %83 = vmatprep.subr.mxu0 0.0
  %84 = vmatpush2.msra.mxu0 0.0
  %85 = vmatprep.subr.mxu0 0.0
  %86 = vmatpush2.msra.mxu0 0.0
  %87 = vmatprep.subr.mxu0 0.0
  %88 = vmatpush2.msra.mxu0 0.0
  %89 = vmatprep.subr.mxu0 0.0
  %90 = vmatpush2.msra.mxu0 0.0
  %91 = vmatprep.subr.mxu0 0.0
  %92 = vmatpush2.msra.mxu0 0.0
  %93 = vmatprep.subr.mxu0 0.0
  %94 = vmatpush2.msra.mxu0 0.0
  %95 = vmatprep.subr.mxu0 0.0
  %96 = vmatpush2.msra.mxu0 0.0
  %97 = vmatprep.subr.mxu0 0.0
  %98 = vmatpush2.msra.mxu0 0.0
  %99 = vmatprep.subr.mxu0 0.0
  %100 = vmatpush2.msra.mxu0 0.0
  %101 = vmatprep.subr.mxu0 0.0
  %102 = vmatpush2.msra.mxu0 0.0
  %103 = vmatprep.subr.mxu0 0.0
  %104 = vmatpush2.msra.mxu0 0.0
  %105 = vmatprep.mubr.f32.mxu0 0.0
  %106 = vmatmul.mubr.f32.gmra.mxu0 %v39
  %v107 = vpop.f32.mrf.mxu0
  %v108 = vadd.f32 0.0, %v107
  %v109 = vpop.f32.mrf.mxu0
  %110 = vdwg.mxu0
  %v111 = vadd.f32 %v36, %v108
  %v112 = vtanh.pop %v111
  %v113 = vlaneseq
  %v114 = vshrl.u32 %v113, 7
  %v115 = vsub.s32 1, %v114
  %v116 = vrot.slane %v27, %v115
  %v117 = vmul.f32 %v112, %v116
  %v118 = vadd.f32 %v34, %v117
  %s119 = scalar_lea.vmem %s0, 16
  %v120 = vld [vmem:[%s119] sm:$0xff]
  %v122 = vsel %vm37, %v112, 0
  %124 = vmatprep.subr.mxu0 0.0
  %125 = vmatpush1.msra.mxu0 0.0
  %126 = vmatprep.subr.mxu0 0.0
  %127 = vmatpush1.msra.mxu0 0.0
  %128 = vmatprep.subr.mxu0 0.0
  %129 = vmatpush1.msra.mxu0 0.0
  %130 = vmatprep.subr.mxu0 0.0
  %131 = vmatpush1.msra.mxu0 0.0
  %132 = vmatprep.subr.mxu0 0.0
  %133 = vmatpush1.msra.mxu0 0.0
  %134 = vmatprep.subr.mxu0 0.0
  %135 = vmatpush1.msra.mxu0 0.0
  %136 = vmatprep.subr.mxu0 0.0
  %137 = vmatpush1.msra.mxu0 0.0
  %138 = vmatprep.subr.mxu0 0.0
  %139 = vmatpush1.msra.mxu0 0.0
  %140 = vmatprep.subr.mxu0 0.0
  %141 = vmatpush1.msra.mxu0 %v26
  %142 = vmatprep.subr.mxu0 0.0
  %143 = vmatpush1.msra.mxu0 %v25
  %144 = vmatprep.subr.mxu0 0.0
  %145 = vmatpush1.msra.mxu0 %v24
  %146 = vmatprep.subr.mxu0 0.0
  %147 = vmatpush1.msra.mxu0 %v23
  %148 = vmatprep.subr.mxu0 0.0
  %149 = vmatpush1.msra.mxu0 %v22
  %150 = vmatprep.subr.mxu0 0.0
  %151 = vmatpush1.msra.mxu0 %v21
  %152 = vmatprep.subr.mxu0 0.0
  %153 = vmatpush1.msra.mxu0 %v20
  %154 = vmatprep.subr.mxu0 0.0
  %155 = vmatpush1.msra.mxu0 %v19
  %156 = vmatprep.subr.mxu0 0.0
  %157 = vmatpush2.msra.mxu0 0.0
  %158 = vmatprep.subr.mxu0 0.0
  %159 = vmatpush2.msra.mxu0 0.0
  %160 = vmatprep.subr.mxu0 0.0
  %161 = vmatpush2.msra.mxu0 0.0
  %162 = vmatprep.subr.mxu0 0.0
  %163 = vmatpush2.msra.mxu0 0.0
  %164 = vmatprep.subr.mxu0 0.0
  %165 = vmatpush2.msra.mxu0 0.0
  %166 = vmatprep.subr.mxu0 0.0
  %167 = vmatpush2.msra.mxu0 0.0
  %168 = vmatprep.subr.mxu0 0.0
  %169 = vmatpush2.msra.mxu0 0.0
  %170 = vmatprep.subr.mxu0 0.0
  %171 = vmatpush2.msra.mxu0 0.0
  %172 = vmatprep.subr.mxu0 0.0
  %173 = vmatpush2.msra.mxu0 0.0
  %174 = vmatprep.subr.mxu0 0.0
  %175 = vmatpush2.msra.mxu0 0.0
  %176 = vmatprep.subr.mxu0 0.0
  %177 = vmatpush2.msra.mxu0 0.0
  %178 = vmatprep.subr.mxu0 0.0
  %179 = vmatpush2.msra.mxu0 0.0
  %180 = vmatprep.subr.mxu0 0.0
  %181 = vmatpush2.msra.mxu0 0.0
  %182 = vmatprep.subr.mxu0 0.0
  %183 = vmatpush2.msra.mxu0 0.0
  %184 = vmatprep.subr.mxu0 0.0
  %185 = vmatpush2.msra.mxu0 0.0
  %186 = vmatprep.subr.mxu0 0.0
  %187 = vmatpush2.msra.mxu0 0.0
  %188 = vmatprep.mubr.f32.mxu0 0.0
  %189 = vmatmul.mubr.f32.gmra.mxu0 %v122
  %v190 = vpop.f32.mrf.mxu0
  %v191 = vadd.f32 0.0, %v190
  %v192 = vpop.f32.mrf.mxu0
  %193 = vdwg.mxu0
  %v194 = vadd.f32 %v120, %v191
  %v195 = vtanh.pop %v194
  %v196 = vlaneseq
  %v197 = vshrl.u32 %v196, 7
  %v198 = vsub.s32 2, %v197
  %v199 = vrot.slane %v27, %v198
  %v200 = vmul.f32 %v195, %v199
  %v201 = vadd.f32 %v118, %v200
  %s202 = scalar_lea.vmem %s0, 24
  %v203 = vld [vmem:[%s202] sm:$0xff]
  %v205 = vsel %vm37, %v195, 0
  %207 = vmatprep.subr.mxu0 0.0
  %208 = vmatpush1.msra.mxu0 0.0
  %209 = vmatprep.subr.mxu0 0.0
  %210 = vmatpush1.msra.mxu0 0.0
  %211 = vmatprep.subr.mxu0 0.0
  %212 = vmatpush1.msra.mxu0 0.0
  %213 = vmatprep.subr.mxu0 0.0
  %214 = vmatpush1.msra.mxu0 0.0
  %215 = vmatprep.subr.mxu0 0.0
  %216 = vmatpush1.msra.mxu0 0.0
  %217 = vmatprep.subr.mxu0 0.0
  %218 = vmatpush1.msra.mxu0 0.0
  %219 = vmatprep.subr.mxu0 0.0
  %220 = vmatpush1.msra.mxu0 0.0
  %221 = vmatprep.subr.mxu0 0.0
  %222 = vmatpush1.msra.mxu0 0.0
  %223 = vmatprep.subr.mxu0 0.0
  %224 = vmatpush1.msra.mxu0 %v26
  %225 = vmatprep.subr.mxu0 0.0
  %226 = vmatpush1.msra.mxu0 %v25
  %227 = vmatprep.subr.mxu0 0.0
  %228 = vmatpush1.msra.mxu0 %v24
  %229 = vmatprep.subr.mxu0 0.0
  %230 = vmatpush1.msra.mxu0 %v23
  %231 = vmatprep.subr.mxu0 0.0
  %232 = vmatpush1.msra.mxu0 %v22
  %233 = vmatprep.subr.mxu0 0.0
  %234 = vmatpush1.msra.mxu0 %v21
  %235 = vmatprep.subr.mxu0 0.0
  %236 = vmatpush1.msra.mxu0 %v20
  %237 = vmatprep.subr.mxu0 0.0
  %238 = vmatpush1.msra.mxu0 %v19
  %239 = vmatprep.subr.mxu0 0.0
  %240 = vmatpush2.msra.mxu0 0.0
  %241 = vmatprep.subr.mxu0 0.0
  %242 = vmatpush2.msra.mxu0 0.0
  %243 = vmatprep.subr.mxu0 0.0
  %244 = vmatpush2.msra.mxu0 0.0
  %245 = vmatprep.subr.mxu0 0.0
  %246 = vmatpush2.msra.mxu0 0.0
  %247 = vmatprep.subr.mxu0 0.0
  %248 = vmatpush2.msra.mxu0 0.0
  %249 = vmatprep.subr.mxu0 0.0
  %250 = vmatpush2.msra.mxu0 0.0
  %251 = vmatprep.subr.mxu0 0.0
  %252 = vmatpush2.msra.mxu0 0.0
  %253 = vmatprep.subr.mxu0 0.0
  %254 = vmatpush2.msra.mxu0 0.0
  %255 = vmatprep.subr.mxu0 0.0
  %256 = vmatpush2.msra.mxu0 0.0
  %257 = vmatprep.subr.mxu0 0.0
  %258 = vmatpush2.msra.mxu0 0.0
  %259 = vmatprep.subr.mxu0 0.0
  %260 = vmatpush2.msra.mxu0 0.0
  %261 = vmatprep.subr.mxu0 0.0
  %262 = vmatpush2.msra.mxu0 0.0
  %263 = vmatprep.subr.mxu0 0.0
  %264 = vmatpush2.msra.mxu0 0.0
  %265 = vmatprep.subr.mxu0 0.0
  %266 = vmatpush2.msra.mxu0 0.0
  %267 = vmatprep.subr.mxu0 0.0
  %268 = vmatpush2.msra.mxu0 0.0
  %269 = vmatprep.subr.mxu0 0.0
  %270 = vmatpush2.msra.mxu0 0.0
  %271 = vmatprep.mubr.f32.mxu0 0.0
  %272 = vmatmul.mubr.f32.gmra.mxu0 %v205
  %v273 = vpop.f32.mrf.mxu0
  %v274 = vadd.f32 0.0, %v273
  %v275 = vpop.f32.mrf.mxu0
  %276 = vdwg.mxu0
  %v277 = vadd.f32 %v203, %v274
  %v278 = vtanh.pop %v277
  %v279 = vlaneseq
  %v280 = vshrl.u32 %v279, 7
  %v281 = vsub.s32 3, %v280
  %v282 = vrot.slane %v27, %v281
  %v283 = vmul.f32 %v278, %v282
  %v284 = vadd.f32 %v201, %v283
  %s285 = scalar_lea.vmem %s0, 32
  %v286 = vld [vmem:[%s285] sm:$0xff]
  %v288 = vsel %vm37, %v278, 0
  %290 = vmatprep.subr.mxu0 0.0
  %291 = vmatpush1.msra.mxu0 0.0
  %292 = vmatprep.subr.mxu0 0.0
  %293 = vmatpush1.msra.mxu0 0.0
  %294 = vmatprep.subr.mxu0 0.0
  %295 = vmatpush1.msra.mxu0 0.0
  %296 = vmatprep.subr.mxu0 0.0
  %297 = vmatpush1.msra.mxu0 0.0
  %298 = vmatprep.subr.mxu0 0.0
  %299 = vmatpush1.msra.mxu0 0.0
  %300 = vmatprep.subr.mxu0 0.0
  %301 = vmatpush1.msra.mxu0 0.0
  %302 = vmatprep.subr.mxu0 0.0
  %303 = vmatpush1.msra.mxu0 0.0
  %304 = vmatprep.subr.mxu0 0.0
  %305 = vmatpush1.msra.mxu0 0.0
  %306 = vmatprep.subr.mxu0 0.0
  %307 = vmatpush1.msra.mxu0 %v26
  %308 = vmatprep.subr.mxu0 0.0
  %309 = vmatpush1.msra.mxu0 %v25
  %310 = vmatprep.subr.mxu0 0.0
  %311 = vmatpush1.msra.mxu0 %v24
  %312 = vmatprep.subr.mxu0 0.0
  %313 = vmatpush1.msra.mxu0 %v23
  %314 = vmatprep.subr.mxu0 0.0
  %315 = vmatpush1.msra.mxu0 %v22
  %316 = vmatprep.subr.mxu0 0.0
  %317 = vmatpush1.msra.mxu0 %v21
  %318 = vmatprep.subr.mxu0 0.0
  %319 = vmatpush1.msra.mxu0 %v20
  %320 = vmatprep.subr.mxu0 0.0
  %321 = vmatpush1.msra.mxu0 %v19
  %322 = vmatprep.subr.mxu0 0.0
  %323 = vmatpush2.msra.mxu0 0.0
  %324 = vmatprep.subr.mxu0 0.0
  %325 = vmatpush2.msra.mxu0 0.0
  %326 = vmatprep.subr.mxu0 0.0
  %327 = vmatpush2.msra.mxu0 0.0
  %328 = vmatprep.subr.mxu0 0.0
  %329 = vmatpush2.msra.mxu0 0.0
  %330 = vmatprep.subr.mxu0 0.0
  %331 = vmatpush2.msra.mxu0 0.0
  %332 = vmatprep.subr.mxu0 0.0
  %333 = vmatpush2.msra.mxu0 0.0
  %334 = vmatprep.subr.mxu0 0.0
  %335 = vmatpush2.msra.mxu0 0.0
  %336 = vmatprep.subr.mxu0 0.0
  %337 = vmatpush2.msra.mxu0 0.0
  %338 = vmatprep.subr.mxu0 0.0
  %339 = vmatpush2.msra.mxu0 0.0
  %340 = vmatprep.subr.mxu0 0.0
  %341 = vmatpush2.msra.mxu0 0.0
  %342 = vmatprep.subr.mxu0 0.0
  %343 = vmatpush2.msra.mxu0 0.0
  %344 = vmatprep.subr.mxu0 0.0
  %345 = vmatpush2.msra.mxu0 0.0
  %346 = vmatprep.subr.mxu0 0.0
  %347 = vmatpush2.msra.mxu0 0.0
  %348 = vmatprep.subr.mxu0 0.0
  %349 = vmatpush2.msra.mxu0 0.0
  %350 = vmatprep.subr.mxu0 0.0
  %351 = vmatpush2.msra.mxu0 0.0
  %352 = vmatprep.subr.mxu0 0.0
  %353 = vmatpush2.msra.mxu0 0.0
  %354 = vmatprep.mubr.f32.mxu0 0.0
  %355 = vmatmul.mubr.f32.gmra.mxu0 %v288
  %v356 = vpop.f32.mrf.mxu0
  %v357 = vadd.f32 0.0, %v356
  %v358 = vpop.f32.mrf.mxu0
  %359 = vdwg.mxu0
  %v360 = vadd.f32 %v286, %v357
  %v361 = vtanh.pop %v360
  %v362 = vlaneseq
  %v363 = vshrl.u32 %v362, 7
  %v364 = vsub.s32 4, %v363
  %v365 = vrot.slane %v27, %v364
  %v366 = vmul.f32 %v361, %v365
  %v367 = vadd.f32 %v284, %v366
  %s368 = scalar_lea.vmem %s0, 40
  %v369 = vld [vmem:[%s368] sm:$0xff]
  %v371 = vsel %vm37, %v361, 0
  %373 = vmatprep.subr.mxu0 0.0
  %374 = vmatpush1.msra.mxu0 0.0
  %375 = vmatprep.subr.mxu0 0.0
  %376 = vmatpush1.msra.mxu0 0.0
  %377 = vmatprep.subr.mxu0 0.0
  %378 = vmatpush1.msra.mxu0 0.0
  %379 = vmatprep.subr.mxu0 0.0
  %380 = vmatpush1.msra.mxu0 0.0
  %381 = vmatprep.subr.mxu0 0.0
  %382 = vmatpush1.msra.mxu0 0.0
  %383 = vmatprep.subr.mxu0 0.0
  %384 = vmatpush1.msra.mxu0 0.0
  %385 = vmatprep.subr.mxu0 0.0
  %386 = vmatpush1.msra.mxu0 0.0
  %387 = vmatprep.subr.mxu0 0.0
  %388 = vmatpush1.msra.mxu0 0.0
  %389 = vmatprep.subr.mxu0 0.0
  %390 = vmatpush1.msra.mxu0 %v26
  %391 = vmatprep.subr.mxu0 0.0
  %392 = vmatpush1.msra.mxu0 %v25
  %393 = vmatprep.subr.mxu0 0.0
  %394 = vmatpush1.msra.mxu0 %v24
  %395 = vmatprep.subr.mxu0 0.0
  %396 = vmatpush1.msra.mxu0 %v23
  %397 = vmatprep.subr.mxu0 0.0
  %398 = vmatpush1.msra.mxu0 %v22
  %399 = vmatprep.subr.mxu0 0.0
  %400 = vmatpush1.msra.mxu0 %v21
  %401 = vmatprep.subr.mxu0 0.0
  %402 = vmatpush1.msra.mxu0 %v20
  %403 = vmatprep.subr.mxu0 0.0
  %404 = vmatpush1.msra.mxu0 %v19
  %405 = vmatprep.subr.mxu0 0.0
  %406 = vmatpush2.msra.mxu0 0.0
  %407 = vmatprep.subr.mxu0 0.0
  %408 = vmatpush2.msra.mxu0 0.0
  %409 = vmatprep.subr.mxu0 0.0
  %410 = vmatpush2.msra.mxu0 0.0
  %411 = vmatprep.subr.mxu0 0.0
  %412 = vmatpush2.msra.mxu0 0.0
  %413 = vmatprep.subr.mxu0 0.0
  %414 = vmatpush2.msra.mxu0 0.0
  %415 = vmatprep.subr.mxu0 0.0
  %416 = vmatpush2.msra.mxu0 0.0
  %417 = vmatprep.subr.mxu0 0.0
  %418 = vmatpush2.msra.mxu0 0.0
  %419 = vmatprep.subr.mxu0 0.0
  %420 = vmatpush2.msra.mxu0 0.0
  %421 = vmatprep.subr.mxu0 0.0
  %422 = vmatpush2.msra.mxu0 0.0
  %423 = vmatprep.subr.mxu0 0.0
  %424 = vmatpush2.msra.mxu0 0.0
  %425 = vmatprep.subr.mxu0 0.0
  %426 = vmatpush2.msra.mxu0 0.0
  %427 = vmatprep.subr.mxu0 0.0
  %428 = vmatpush2.msra.mxu0 0.0
  %429 = vmatprep.subr.mxu0 0.0
  %430 = vmatpush2.msra.mxu0 0.0
  %431 = vmatprep.subr.mxu0 0.0
  %432 = vmatpush2.msra.mxu0 0.0
  %433 = vmatprep.subr.mxu0 0.0
  %434 = vmatpush2.msra.mxu0 0.0
  %435 = vmatprep.subr.mxu0 0.0
  %436 = vmatpush2.msra.mxu0 0.0
  %437 = vmatprep.mubr.f32.mxu0 0.0
  %438 = vmatmul.mubr.f32.gmra.mxu0 %v371
  %v439 = vpop.f32.mrf.mxu0
  %v440 = vadd.f32 0.0, %v439
  %v441 = vpop.f32.mrf.mxu0
  %442 = vdwg.mxu0
  %v443 = vadd.f32 %v369, %v440
  %v444 = vtanh.pop %v443
  %v445 = vlaneseq
  %v446 = vshrl.u32 %v445, 7
  %v447 = vsub.s32 5, %v446
  %v448 = vrot.slane %v27, %v447
  %v449 = vmul.f32 %v444, %v448
  %v450 = vadd.f32 %v367, %v449
  %s451 = scalar_lea.vmem %s0, 48
  %v452 = vld [vmem:[%s451] sm:$0xff]
  %v454 = vsel %vm37, %v444, 0
  %456 = vmatprep.subr.mxu0 0.0
  %457 = vmatpush1.msra.mxu0 0.0
  %458 = vmatprep.subr.mxu0 0.0
  %459 = vmatpush1.msra.mxu0 0.0
  %460 = vmatprep.subr.mxu0 0.0
  %461 = vmatpush1.msra.mxu0 0.0
  %462 = vmatprep.subr.mxu0 0.0
  %463 = vmatpush1.msra.mxu0 0.0
  %464 = vmatprep.subr.mxu0 0.0
  %465 = vmatpush1.msra.mxu0 0.0
  %466 = vmatprep.subr.mxu0 0.0
  %467 = vmatpush1.msra.mxu0 0.0
  %468 = vmatprep.subr.mxu0 0.0
  %469 = vmatpush1.msra.mxu0 0.0
  %470 = vmatprep.subr.mxu0 0.0
  %471 = vmatpush1.msra.mxu0 0.0
  %472 = vmatprep.subr.mxu0 0.0
  %473 = vmatpush1.msra.mxu0 %v26
  %474 = vmatprep.subr.mxu0 0.0
  %475 = vmatpush1.msra.mxu0 %v25
  %476 = vmatprep.subr.mxu0 0.0
  %477 = vmatpush1.msra.mxu0 %v24
  %478 = vmatprep.subr.mxu0 0.0
  %479 = vmatpush1.msra.mxu0 %v23
  %480 = vmatprep.subr.mxu0 0.0
  %481 = vmatpush1.msra.mxu0 %v22
  %482 = vmatprep.subr.mxu0 0.0
  %483 = vmatpush1.msra.mxu0 %v21
  %484 = vmatprep.subr.mxu0 0.0
  %485 = vmatpush1.msra.mxu0 %v20
  %486 = vmatprep.subr.mxu0 0.0
  %487 = vmatpush1.msra.mxu0 %v19
  %488 = vmatprep.subr.mxu0 0.0
  %489 = vmatpush2.msra.mxu0 0.0
  %490 = vmatprep.subr.mxu0 0.0
  %491 = vmatpush2.msra.mxu0 0.0
  %492 = vmatprep.subr.mxu0 0.0
  %493 = vmatpush2.msra.mxu0 0.0
  %494 = vmatprep.subr.mxu0 0.0
  %495 = vmatpush2.msra.mxu0 0.0
  %496 = vmatprep.subr.mxu0 0.0
  %497 = vmatpush2.msra.mxu0 0.0
  %498 = vmatprep.subr.mxu0 0.0
  %499 = vmatpush2.msra.mxu0 0.0
  %500 = vmatprep.subr.mxu0 0.0
  %501 = vmatpush2.msra.mxu0 0.0
  %502 = vmatprep.subr.mxu0 0.0
  %503 = vmatpush2.msra.mxu0 0.0
  %504 = vmatprep.subr.mxu0 0.0
  %505 = vmatpush2.msra.mxu0 0.0
  %506 = vmatprep.subr.mxu0 0.0
  %507 = vmatpush2.msra.mxu0 0.0
  %508 = vmatprep.subr.mxu0 0.0
  %509 = vmatpush2.msra.mxu0 0.0
  %510 = vmatprep.subr.mxu0 0.0
  %511 = vmatpush2.msra.mxu0 0.0
  %512 = vmatprep.subr.mxu0 0.0
  %513 = vmatpush2.msra.mxu0 0.0
  %514 = vmatprep.subr.mxu0 0.0
  %515 = vmatpush2.msra.mxu0 0.0
  %516 = vmatprep.subr.mxu0 0.0
  %517 = vmatpush2.msra.mxu0 0.0
  %518 = vmatprep.subr.mxu0 0.0
  %519 = vmatpush2.msra.mxu0 0.0
  %520 = vmatprep.mubr.f32.mxu0 0.0
  %521 = vmatmul.mubr.f32.gmra.mxu0 %v454
  %v522 = vpop.f32.mrf.mxu0
  %v523 = vadd.f32 0.0, %v522
  %v524 = vpop.f32.mrf.mxu0
  %525 = vdwg.mxu0
  %v526 = vadd.f32 %v452, %v523
  %v527 = vtanh.pop %v526
  %v528 = vlaneseq
  %v529 = vshrl.u32 %v528, 7
  %v530 = vsub.s32 6, %v529
  %v531 = vrot.slane %v27, %v530
  %v532 = vmul.f32 %v527, %v531
  %v533 = vadd.f32 %v450, %v532
  %s534 = scalar_lea.vmem %s0, 56
  %v535 = vld [vmem:[%s534] sm:$0xff]
  %v537 = vsel %vm37, %v527, 0
  %539 = vmatprep.subr.mxu0 0.0
  %540 = vmatpush1.msra.mxu0 0.0
  %541 = vmatprep.subr.mxu0 0.0
  %542 = vmatpush1.msra.mxu0 0.0
  %543 = vmatprep.subr.mxu0 0.0
  %544 = vmatpush1.msra.mxu0 0.0
  %545 = vmatprep.subr.mxu0 0.0
  %546 = vmatpush1.msra.mxu0 0.0
  %547 = vmatprep.subr.mxu0 0.0
  %548 = vmatpush1.msra.mxu0 0.0
  %549 = vmatprep.subr.mxu0 0.0
  %550 = vmatpush1.msra.mxu0 0.0
  %551 = vmatprep.subr.mxu0 0.0
  %552 = vmatpush1.msra.mxu0 0.0
  %553 = vmatprep.subr.mxu0 0.0
  %554 = vmatpush1.msra.mxu0 0.0
  %555 = vmatprep.subr.mxu0 0.0
  %556 = vmatpush1.msra.mxu0 %v26
  %557 = vmatprep.subr.mxu0 0.0
  %558 = vmatpush1.msra.mxu0 %v25
  %559 = vmatprep.subr.mxu0 0.0
  %560 = vmatpush1.msra.mxu0 %v24
  %561 = vmatprep.subr.mxu0 0.0
  %562 = vmatpush1.msra.mxu0 %v23
  %563 = vmatprep.subr.mxu0 0.0
  %564 = vmatpush1.msra.mxu0 %v22
  %565 = vmatprep.subr.mxu0 0.0
  %566 = vmatpush1.msra.mxu0 %v21
  %567 = vmatprep.subr.mxu0 0.0
  %568 = vmatpush1.msra.mxu0 %v20
  %569 = vmatprep.subr.mxu0 0.0
  %570 = vmatpush1.msra.mxu0 %v19
  %571 = vmatprep.subr.mxu0 0.0
  %572 = vmatpush2.msra.mxu0 0.0
  %573 = vmatprep.subr.mxu0 0.0
  %574 = vmatpush2.msra.mxu0 0.0
  %575 = vmatprep.subr.mxu0 0.0
  %576 = vmatpush2.msra.mxu0 0.0
  %577 = vmatprep.subr.mxu0 0.0
  %578 = vmatpush2.msra.mxu0 0.0
  %579 = vmatprep.subr.mxu0 0.0
  %580 = vmatpush2.msra.mxu0 0.0
  %581 = vmatprep.subr.mxu0 0.0
  %582 = vmatpush2.msra.mxu0 0.0
  %583 = vmatprep.subr.mxu0 0.0
  %584 = vmatpush2.msra.mxu0 0.0
  %585 = vmatprep.subr.mxu0 0.0
  %586 = vmatpush2.msra.mxu0 0.0
  %587 = vmatprep.subr.mxu0 0.0
  %588 = vmatpush2.msra.mxu0 0.0
  %589 = vmatprep.subr.mxu0 0.0
  %590 = vmatpush2.msra.mxu0 0.0
  %591 = vmatprep.subr.mxu0 0.0
  %592 = vmatpush2.msra.mxu0 0.0
  %593 = vmatprep.subr.mxu0 0.0
  %594 = vmatpush2.msra.mxu0 0.0
  %595 = vmatprep.subr.mxu0 0.0
  %596 = vmatpush2.msra.mxu0 0.0
  %597 = vmatprep.subr.mxu0 0.0
  %598 = vmatpush2.msra.mxu0 0.0
  %599 = vmatprep.subr.mxu0 0.0
  %600 = vmatpush2.msra.mxu0 0.0
  %601 = vmatprep.subr.mxu0 0.0
  %602 = vmatpush2.msra.mxu0 0.0
  %603 = vmatprep.mubr.f32.mxu0 0.0
  %604 = vmatmul.mubr.f32.gmra.mxu0 %v537
  %v605 = vpop.f32.mrf.mxu0
  %v606 = vadd.f32 0.0, %v605
  %v607 = vpop.f32.mrf.mxu0
  %608 = vdwg.mxu0
  %v609 = vadd.f32 %v535, %v606
  %v610 = vtanh.pop %v609
  %v611 = vlaneseq
  %v612 = vshrl.u32 %v611, 7
  %v613 = vsub.s32 7, %v612
  %v614 = vrot.slane %v27, %v613
  %v615 = vmul.f32 %v610, %v614
  %v616 = vadd.f32 %v533, %v615
  %v617 = vsel %vm37, %v616, 0.0
  %618 = vadd.xlane.f32.xlu0 %v617
  %v619 = vpop.xlane.xlu0 %618
  %v620 = vld [vmem:[#allocation2] sm:$0x1]
  %v622 = vlaneseq
  %v623 = vshrl.u32 %v622, 7
  %v624 = vsub.s32 0, %v623
  %v625 = vrot.slane %v620, %v624
  %v627 = vadd.f32 %v619, %v625
  %vm628 = vcmask 7168
  %629 = vst.msk [vmem:[%s4] sm:$0xff] %vm628, %v627
  // Predicated region
  $region18: #{rnnnet_forward.1} parent=0 // pred_check
    _
  $region19: #{rnnnet_forward.1} parent=0 // pred_check_branch
    %631 = sbr.rel (0) target = $region21
  $region20: #{rnnnet_forward.1} parent=0 // pred_region
    _
  $region21: #{rnnnet_forward.1} parent=0 // pred_fallthru
    _
  // Predicated region
  $region22: #{rnnnet_forward.1} parent=0 // pred_check
    _
  $region23: #{rnnnet_forward.1} parent=0 // pred_check_branch
    %633 = sbr.rel (0) target = $region25
  $region24: #{rnnnet_forward.1} parent=0 // pred_region
    _
  $region25: #{rnnnet_forward.1} parent=0 // pred_fallthru
    _

</llo_original>
